<compile_context>
chip_gen: v7x
topology: tpu7x:2x2x1
jax: 0.10.0
libtpu: 0.0.40
codegen_flags: <defaults>
</compile_context>

<pallas_src>
import jax
import jax.numpy as jnp
from jax.experimental import pallas as pl
from jax.experimental.pallas import tpu as pltpu


def rnn_kernel(xt_ref, wih_ref, whh_ref, brnn_ref, wfc_ref, bfc_ref, out_ref):
    # xt_ref   : (T*B, I)  time-major flattened input (rows t*B..t*B+B-1 = step t)
    # wih_ref  : (I, H)    W_ih^T
    # whh_ref  : (H, H)    W_hh^T
    # brnn_ref : (1, H)    b_ih + b_hh
    # wfc_ref  : (H, O)    W_fc^T
    # bfc_ref  : (1, O)
    # out_ref  : (B, O)
    TB = xt_ref.shape[0]
    B = out_ref.shape[0]
    T = TB // B

    # Prologue: project every timestep's input contribution with one MXU call.
    xp = (jnp.dot(xt_ref[...], wih_ref[...], preferred_element_type=jnp.float32)
          + brnn_ref[...])                                  # (T*B, H)

    whh = whh_ref[...]                                      # resident across the loop

    # t = 0: h_prev is zeros, so h1 = tanh(xp_0) -- no matmul needed.
    h = jnp.tanh(xp[0:B, :])

    # Remaining steps, fully unrolled (static T).
    for t in range(1, T):
        h = jnp.tanh(xp[t * B:(t + 1) * B, :]
                     + jnp.dot(h, whh, preferred_element_type=jnp.float32))

    # Final Linear on the last hidden state.
    out_ref[...] = (jnp.dot(h, wfc_ref[...], preferred_element_type=jnp.float32)
                    + bfc_ref[...]).astype(out_ref.dtype)


def prepare_params(w_ih, w_hh, b_ih, b_hh, w_fc, b_fc):
    """One-time weight preparation (hoisted out of the per-call path).

    PyTorch shapes in: w_ih (H, I), w_hh (H, H), b_ih (H,), b_hh (H,),
                       w_fc (O, H), b_fc (O,).
    """
    H = w_hh.shape[0]
    O = w_fc.shape[0]
    return (
        jnp.transpose(w_ih),              # (I, H)
        jnp.transpose(w_hh),              # (H, H)
        (b_ih + b_hh).reshape(1, H),      # fused recurrent bias
        jnp.transpose(w_fc),              # (H, O)
        b_fc.reshape(1, O),
    )


def rnn_forward(x, params):
    """x: (B, T, I) batch-first (PyTorch batch_first=True). Returns fc(h_T): (B, O)."""
    B, T, I = x.shape
    wih_t, whh_t, b_rnn, wfc_t, bfc2 = params
    O = wfc_t.shape[1]

    # Time-major, flattened so timestep t occupies rows [t*B, (t+1)*B).
    xt = jnp.transpose(x, (1, 0, 2)).reshape(T * B, I)

    in_specs = [pl.BlockSpec(memory_space=pltpu.MemorySpace.VMEM) for _ in range(6)]
    out_specs = pl.BlockSpec(memory_space=pltpu.MemorySpace.VMEM)

    return pl.pallas_call(
        rnn_kernel,
        out_shape=jax.ShapeDtypeStruct((B, O), x.dtype),
        in_specs=in_specs,
        out_specs=out_specs,
    )(xt, wih_t, whh_t, b_rnn, wfc_t, bfc2)


def rnn_reference(x, w_ih, w_hh, b_ih, b_hh, w_fc, b_fc):
    """Pure-JAX reference matching PyTorch nn.RNN(tanh, batch_first) + Linear."""
    B, T, _ = x.shape
    H = w_hh.shape[0]
    h = jnp.zeros((B, H), dtype=jnp.float32)
    for t in range(T):
        h = jnp.tanh(x[:, t, :] @ w_ih.T + b_ih + h @ w_hh.T + b_hh)
    return h @ w_fc.T + b_fc


if __name__ == "__main__":
    B, T = 2, 8
    input_size, hidden_size, output_size = 16, 32, 8

    key = jax.random.PRNGKey(0)
    kx, k1, k2, k3, k4, k5, k6 = jax.random.split(key, 7)

    # Deterministic parameter init (PyTorch-style uniform(-1/sqrt(H), 1/sqrt(H))).
    bound = 1.0 / jnp.sqrt(jnp.float32(hidden_size))
    w_ih = jax.random.uniform(k1, (hidden_size, input_size), jnp.float32, -bound, bound)
    w_hh = jax.random.uniform(k2, (hidden_size, hidden_size), jnp.float32, -bound, bound)
    b_ih = jax.random.uniform(k3, (hidden_size,), jnp.float32, -bound, bound)
    b_hh = jax.random.uniform(k4, (hidden_size,), jnp.float32, -bound, bound)
    w_fc = jax.random.uniform(k5, (output_size, hidden_size), jnp.float32, -bound, bound)
    b_fc = jax.random.uniform(k6, (output_size,), jnp.float32, -bound, bound)

    x = jax.random.normal(kx, (B, T, input_size), jnp.float32)

    # Weight prep done once (hoisted out of the per-call path).
    params = prepare_params(w_ih, w_hh, b_ih, b_hh, w_fc, b_fc)

    out = jax.jit(rnn_forward)(x, params)
    out = jax.block_until_ready(out)

    ref = rnn_reference(x, w_ih, w_hh, b_ih, b_hh, w_fc, b_fc)
    assert out.shape == (B, output_size)
    assert jnp.allclose(out, ref, atol=1e-4, rtol=1e-4), "mismatch vs reference"

    print("KERNEL_OK")
</pallas_src>

<mosaic_0001>
module attributes {stable_mosaic.version = 11 : i64} {
  func.func @rnn_kernel(%arg0: memref<16x16xf32, #tpu.memory_space<vmem>>, %arg1: memref<16x32xf32, #tpu.memory_space<vmem>>, %arg2: memref<32x32xf32, #tpu.memory_space<vmem>>, %arg3: memref<1x32xf32, #tpu.memory_space<vmem>>, %arg4: memref<32x8xf32, #tpu.memory_space<vmem>>, %arg5: memref<1x8xf32, #tpu.memory_space<vmem>>, %arg6: memref<2x8xf32, #tpu.memory_space<vmem>>) attributes {dimension_semantics = [], scalar_prefetch = 0 : i64, scratch_operands = 0 : i64, tpu.core_type = #tpu.core_type<tc>} {
    %c0 = arith.constant 0 : index
    %c0_0 = arith.constant 0 : index
    %0 = vector.load %arg0[%c0, %c0_0] : memref<16x16xf32, #tpu.memory_space<vmem>>, vector<16x16xf32>
    %c0_1 = arith.constant 0 : index
    %c0_2 = arith.constant 0 : index
    %1 = vector.load %arg1[%c0_1, %c0_2] : memref<16x32xf32, #tpu.memory_space<vmem>>, vector<16x32xf32>
    %cst = arith.constant dense<0.000000e+00> : vector<16x32xf32>
    %2 = tpu.matmul %0, %1, %cst {dimension_numbers = #tpu.dot_dimension_numbers<[1], [0], [0], [1], [0, 0, 1, 1], [], []>} : vector<16x16xf32>, vector<16x32xf32>, vector<16x32xf32> -> vector<16x32xf32>
    %c0_3 = arith.constant 0 : index
    %c0_4 = arith.constant 0 : index
    %3 = vector.load %arg3[%c0_3, %c0_4] : memref<1x32xf32, #tpu.memory_space<vmem>>, vector<1x32xf32>
    %4 = vector.broadcast %3 : vector<1x32xf32> to vector<16x32xf32>
    %5 = arith.addf %2, %4 : vector<16x32xf32>
    %c0_5 = arith.constant 0 : index
    %c0_6 = arith.constant 0 : index
    %6 = vector.load %arg2[%c0_5, %c0_6] : memref<32x32xf32, #tpu.memory_space<vmem>>, vector<32x32xf32>
    %7 = vector.extract_strided_slice %5 {offsets = [0, 0], sizes = [2, 32], strides = [1, 1]} : vector<16x32xf32> to vector<2x32xf32>
    %8 = math.tanh %7 : vector<2x32xf32>
    %9 = vector.extract_strided_slice %5 {offsets = [2, 0], sizes = [2, 32], strides = [1, 1]} : vector<16x32xf32> to vector<2x32xf32>
    %cst_7 = arith.constant dense<0.000000e+00> : vector<2x32xf32>
    %10 = tpu.matmul %8, %6, %cst_7 {dimension_numbers = #tpu.dot_dimension_numbers<[1], [0], [0], [1], [0, 0, 1, 1], [], []>} : vector<2x32xf32>, vector<32x32xf32>, vector<2x32xf32> -> vector<2x32xf32>
    %11 = arith.addf %9, %10 : vector<2x32xf32>
    %12 = math.tanh %11 : vector<2x32xf32>
    %13 = vector.extract_strided_slice %5 {offsets = [4, 0], sizes = [2, 32], strides = [1, 1]} : vector<16x32xf32> to vector<2x32xf32>
    %cst_8 = arith.constant dense<0.000000e+00> : vector<2x32xf32>
    %14 = tpu.matmul %12, %6, %cst_8 {dimension_numbers = #tpu.dot_dimension_numbers<[1], [0], [0], [1], [0, 0, 1, 1], [], []>} : vector<2x32xf32>, vector<32x32xf32>, vector<2x32xf32> -> vector<2x32xf32>
    %15 = arith.addf %13, %14 : vector<2x32xf32>
    %16 = math.tanh %15 : vector<2x32xf32>
    %17 = vector.extract_strided_slice %5 {offsets = [6, 0], sizes = [2, 32], strides = [1, 1]} : vector<16x32xf32> to vector<2x32xf32>
    %cst_9 = arith.constant dense<0.000000e+00> : vector<2x32xf32>
    %18 = tpu.matmul %16, %6, %cst_9 {dimension_numbers = #tpu.dot_dimension_numbers<[1], [0], [0], [1], [0, 0, 1, 1], [], []>} : vector<2x32xf32>, vector<32x32xf32>, vector<2x32xf32> -> vector<2x32xf32>
    %19 = arith.addf %17, %18 : vector<2x32xf32>
    %20 = math.tanh %19 : vector<2x32xf32>
    %21 = vector.extract_strided_slice %5 {offsets = [8, 0], sizes = [2, 32], strides = [1, 1]} : vector<16x32xf32> to vector<2x32xf32>
    %cst_10 = arith.constant dense<0.000000e+00> : vector<2x32xf32>
    %22 = tpu.matmul %20, %6, %cst_10 {dimension_numbers = #tpu.dot_dimension_numbers<[1], [0], [0], [1], [0, 0, 1, 1], [], []>} : vector<2x32xf32>, vector<32x32xf32>, vector<2x32xf32> -> vector<2x32xf32>
    %23 = arith.addf %21, %22 : vector<2x32xf32>
    %24 = math.tanh %23 : vector<2x32xf32>
    %25 = vector.extract_strided_slice %5 {offsets = [10, 0], sizes = [2, 32], strides = [1, 1]} : vector<16x32xf32> to vector<2x32xf32>
    %cst_11 = arith.constant dense<0.000000e+00> : vector<2x32xf32>
    %26 = tpu.matmul %24, %6, %cst_11 {dimension_numbers = #tpu.dot_dimension_numbers<[1], [0], [0], [1], [0, 0, 1, 1], [], []>} : vector<2x32xf32>, vector<32x32xf32>, vector<2x32xf32> -> vector<2x32xf32>
    %27 = arith.addf %25, %26 : vector<2x32xf32>
    %28 = math.tanh %27 : vector<2x32xf32>
    %29 = vector.extract_strided_slice %5 {offsets = [12, 0], sizes = [2, 32], strides = [1, 1]} : vector<16x32xf32> to vector<2x32xf32>
    %cst_12 = arith.constant dense<0.000000e+00> : vector<2x32xf32>
    %30 = tpu.matmul %28, %6, %cst_12 {dimension_numbers = #tpu.dot_dimension_numbers<[1], [0], [0], [1], [0, 0, 1, 1], [], []>} : vector<2x32xf32>, vector<32x32xf32>, vector<2x32xf32> -> vector<2x32xf32>
    %31 = arith.addf %29, %30 : vector<2x32xf32>
    %32 = math.tanh %31 : vector<2x32xf32>
    %33 = vector.extract_strided_slice %5 {offsets = [14, 0], sizes = [2, 32], strides = [1, 1]} : vector<16x32xf32> to vector<2x32xf32>
    %cst_13 = arith.constant dense<0.000000e+00> : vector<2x32xf32>
    %34 = tpu.matmul %32, %6, %cst_13 {dimension_numbers = #tpu.dot_dimension_numbers<[1], [0], [0], [1], [0, 0, 1, 1], [], []>} : vector<2x32xf32>, vector<32x32xf32>, vector<2x32xf32> -> vector<2x32xf32>
    %35 = arith.addf %33, %34 : vector<2x32xf32>
    %36 = math.tanh %35 : vector<2x32xf32>
    %c0_14 = arith.constant 0 : index
    %c0_15 = arith.constant 0 : index
    %37 = vector.load %arg4[%c0_14, %c0_15] : memref<32x8xf32, #tpu.memory_space<vmem>>, vector<32x8xf32>
    %cst_16 = arith.constant dense<0.000000e+00> : vector<2x8xf32>
    %38 = tpu.matmul %36, %37, %cst_16 {dimension_numbers = #tpu.dot_dimension_numbers<[1], [0], [0], [1], [0, 0, 1, 1], [], []>} : vector<2x32xf32>, vector<32x8xf32>, vector<2x8xf32> -> vector<2x8xf32>
    %c0_17 = arith.constant 0 : index
    %c0_18 = arith.constant 0 : index
    %39 = vector.load %arg5[%c0_17, %c0_18] : memref<1x8xf32, #tpu.memory_space<vmem>>, vector<1x8xf32>
    %40 = vector.broadcast %39 : vector<1x8xf32> to vector<2x8xf32>
    %41 = arith.addf %38, %40 : vector<2x8xf32>
    %c0_19 = arith.constant 0 : index
    %c0_20 = arith.constant 0 : index
    %42 = vector.load %arg6[%c0_19, %c0_20] : memref<2x8xf32, #tpu.memory_space<vmem>>, vector<2x8xf32>
    tpu.vector_store %arg6[%c0_19, %c0_20], %41 {strides = array<i32>} : memref<2x8xf32, #tpu.memory_space<vmem>>, vector<2x8xf32>,
    return
  }
}

</mosaic_0001>

<llo_original>
// kernel: rnn_forward.1
$region0: #{rnn_forward.1}
  #allocation0 [shape = 'u32[]', space=smem, size = 0x4, offset = 0x4, fixed_abs, tag = 'smem constant byte address 0x4 - core index']
  #allocation1 [shape = 'u32[144,128]{1,0:T(1,128)}', space=vmem, size = 0x12000, scoped, tag = 'internal scratch']
  %s0 = inlined_call_operand.vmem [shape: f32[16,16], index: 0, kind: input, shape index: {}]
  %s1 = inlined_call_operand.vmem [shape: f32[16,32], index: 1, kind: input, shape index: {}]
  %s2 = inlined_call_operand.vmem [shape: f32[32,32], index: 2, kind: input, shape index: {}]
  %s3 = inlined_call_operand.vmem [shape: f32[1,32], index: 3, kind: input, shape index: {}]
  %s4 = inlined_call_operand.vmem [shape: f32[32,8], index: 4, kind: input, shape index: {}]
  %s5 = inlined_call_operand.vmem [shape: f32[1,8], index: 5, kind: input, shape index: {}]
  %s6 = inlined_call_operand.hbm [shape: f32[2,8], index: 6, kind: output, shape index: {}]
  %s7 = sld [smem:[#allocation0]]
  $region34: #{rnn_forward.1} parent=0
    _
  %s9 = ssub.s32 1, %s7
  %s10 = scalar_select 0, %s9, %s7
  $region1: #{rnn_forward.1} parent=0
    #allocation2 [shape = 'u8[1024]{0}', space=vmem, size = 0x400, scoped, tag = 'output window, operand 0, single buffered']
    #allocation3 [shape = 's32[1]{0}', space=sflag, size = 0x4, scoped, tag = 'scoped memory for rnn_forward.1']
    %11 = vsyncpa [#allocation3], 0
    // Predicated region
    $region2: #{rnn_forward.1} parent=1 // pred_check
      _
    $region3: #{rnn_forward.1} parent=1 // pred_check_branch
      %13 = sbr.rel (0) target = $region5
    $region4: #{rnn_forward.1} parent=1 // pred_region
      _
    $region5: #{rnn_forward.1} parent=1 // pred_fallthru
      _
    // Predicated region
    $region6: #{rnn_forward.1} parent=1 // pred_check
      _
    $region7: #{rnn_forward.1} parent=1 // pred_check_branch
      %15 = sbr.rel (0) target = $region9
    $region8: #{rnn_forward.1} parent=1 // pred_region
      _
    $region9: #{rnn_forward.1} parent=1 // pred_fallthru
      _
    // Predicated region
    $region10: #{rnn_forward.1} parent=1 // pred_check
      _
    $region11: #{rnn_forward.1} parent=1 // pred_check_branch
      %17 = sbr.rel (0) target = $region13
    $region12: #{rnn_forward.1} parent=1 // pred_region
      _
    $region13: #{rnn_forward.1} parent=1 // pred_fallthru
      _
    // Predicated region
    $region14: #{rnn_forward.1} parent=1 // pred_check
      _
    $region15: #{rnn_forward.1} parent=1 // pred_check_branch
      %19 = sbr.rel (0) target = $region17
    $region16: #{rnn_forward.1} parent=1 // pred_region
      _
    $region17: #{rnn_forward.1} parent=1 // pred_fallthru
      _
    // Predicated region
    $region18: #{rnn_forward.1} parent=1 // pred_check
      _
    $region19: #{rnn_forward.1} parent=1 // pred_check_branch
      %21 = sbr.rel (0) target = $region21
    $region20: #{rnn_forward.1} parent=1 // pred_region
      _
    $region21: #{rnn_forward.1} parent=1 // pred_fallthru
      _
    // Predicated region
    $region22: #{rnn_forward.1} parent=1 // pred_check
      _
    $region23: #{rnn_forward.1} parent=1 // pred_check_branch
      %23 = sbr.rel (0) target = $region25
    $region24: #{rnn_forward.1} parent=1 // pred_region
      _
    $region25: #{rnn_forward.1} parent=1 // pred_fallthru
      _
    %v24 = vld [vmem:[%s0] sm:$0xff]
    %v25 = vld [vmem:[%s0 + $0x8] sm:$0xff]
    %v26 = vld [vmem:[%s1] sm:$0xff]
    %v27 = vld [vmem:[%s1 + $0x8] sm:$0xff]
    %v28 = vld [vmem:[%s3] sm:$0x1]
    %v30 = vlaneseq
    %v31 = vshrl.u32 %v30, 7
    %v32 = vsub.s32 0, %v31
    %v33 = vrot.slane %v28, %v32
    %vm35 = vcmask 130048
    %v37 = vsel %vm35, %v24, 0
    %v40 = vsel %vm35, %v25, 0
    %42 = vmatprep.subr.mxu0 0.0
    %43 = vmatpush1.msra.mxu0 %v26
    %44 = vmatprep.subr.mxu0 0.0
    %45 = vmatpush1.msra.mxu0 %v27
    %46 = vmatprep.subr.mxu0 0.0
    %47 = vmatpush1.msra.mxu0 0.0
    %48 = vmatprep.subr.mxu0 0.0
    %49 = vmatpush1.msra.mxu0 0.0
    %50 = vmatprep.subr.mxu0 0.0
    %51 = vmatpush1.msra.mxu0 0.0
    %52 = vmatprep.subr.mxu0 0.0
    %53 = vmatpush1.msra.mxu0 0.0
    %54 = vmatprep.subr.mxu0 0.0
    %55 = vmatpush1.msra.mxu0 0.0
    %56 = vmatprep.subr.mxu0 0.0
    %57 = vmatpush1.msra.mxu0 0.0
    %58 = vmatprep.subr.mxu0 0.0
    %59 = vmatpush1.msra.mxu0 0.0
    %60 = vmatprep.subr.mxu0 0.0
    %61 = vmatpush1.msra.mxu0 0.0
    %62 = vmatprep.subr.mxu0 0.0
    %63 = vmatpush1.msra.mxu0 0.0
    %64 = vmatprep.subr.mxu0 0.0
    %65 = vmatpush1.msra.mxu0 0.0
    %66 = vmatprep.subr.mxu0 0.0
    %67 = vmatpush1.msra.mxu0 0.0
    %68 = vmatprep.subr.mxu0 0.0
    %69 = vmatpush1.msra.mxu0 0.0
    %70 = vmatprep.subr.mxu0 0.0
    %71 = vmatpush1.msra.mxu0 0.0
    %72 = vmatprep.subr.mxu0 0.0
    %73 = vmatpush1.msra.mxu0 0.0
    %74 = vmatprep.subr.mxu0 0.0
    %75 = vmatpush1.msra.mxu0 0.0
    %76 = vmatprep.subr.mxu0 0.0
    %77 = vmatpush1.msra.mxu0 0.0
    %78 = vmatprep.subr.mxu0 0.0
    %79 = vmatpush1.msra.mxu0 0.0
    %80 = vmatprep.subr.mxu0 0.0
    %81 = vmatpush1.msra.mxu0 0.0
    %82 = vmatprep.subr.mxu0 0.0
    %83 = vmatpush1.msra.mxu0 0.0
    %84 = vmatprep.subr.mxu0 0.0
    %85 = vmatpush1.msra.mxu0 0.0
    %86 = vmatprep.subr.mxu0 0.0
    %87 = vmatpush1.msra.mxu0 0.0
    %88 = vmatprep.subr.mxu0 0.0
    %89 = vmatpush1.msra.mxu0 0.0
    %90 = vmatprep.subr.mxu0 0.0
    %91 = vmatpush1.msra.mxu0 0.0
    %92 = vmatprep.subr.mxu0 0.0
    %93 = vmatpush1.msra.mxu0 0.0
    %94 = vmatprep.subr.mxu0 0.0
    %95 = vmatpush1.msra.mxu0 0.0
    %96 = vmatprep.subr.mxu0 0.0
    %97 = vmatpush1.msra.mxu0 0.0
    %98 = vmatprep.subr.mxu0 0.0
    %99 = vmatpush1.msra.mxu0 0.0
    %100 = vmatprep.subr.mxu0 0.0
    %101 = vmatpush1.msra.mxu0 0.0
    %102 = vmatprep.subr.mxu0 0.0
    %103 = vmatpush1.msra.mxu0 0.0
    %104 = vmatprep.subr.mxu0 0.0
    %105 = vmatpush1.msra.mxu0 0.0
    %106 = vmatprep.mubr.f32.mxu0 0.0
    %107 = vmatmul.mubr.f32.gmra.mrb[0].mxu0 %v37
    %v108 = vpop.f32.mrb[0].mxu0
    %v109 = vadd.f32 %v33, %v108
    %v110 = vpop.f32.mrb[0].mxu0
    %111 = vmatprep.mubr.f32.mxu0 0.0
    %112 = vmatmul.mubr.f32.gmra.mrb[0].mxu0 %v40
    %v113 = vpop.f32.mrb[0].mxu0
    %v114 = vadd.f32 %v33, %v113
    %v115 = vpop.f32.mrb[0].mxu0
    %116 = vdwg.mxu0
    %v117 = vld [vmem:[%s2] sm:$0xff]
    %v118 = vld [vmem:[%s2 + $0x8] sm:$0xff]
    %v119 = vld [vmem:[%s2 + $0x10] sm:$0xff]
    %v120 = vld [vmem:[%s2 + $0x18] sm:$0xff]
    %v121 = vtanh.pop %v109
    %vm122 = vcmask 261120
    %v124 = vsel %vm122, %v121, 0
    %126 = vmatprep.subr.mxu0 0.0
    %127 = vmatpush1.msra.mxu0 %v117
    %128 = vmatprep.subr.mxu0 0.0
    %129 = vmatpush1.msra.mxu0 %v118
    %130 = vmatprep.subr.mxu0 0.0
    %131 = vmatpush1.msra.mxu0 %v119
    %132 = vmatprep.subr.mxu0 0.0
    %133 = vmatpush1.msra.mxu0 %v120
    %134 = vmatprep.subr.mxu0 0.0
    %135 = vmatpush1.msra.mxu0 0.0
    %136 = vmatprep.subr.mxu0 0.0
    %137 = vmatpush1.msra.mxu0 0.0
    %138 = vmatprep.subr.mxu0 0.0
    %139 = vmatpush1.msra.mxu0 0.0
    %140 = vmatprep.subr.mxu0 0.0
    %141 = vmatpush1.msra.mxu0 0.0
    %142 = vmatprep.subr.mxu0 0.0
    %143 = vmatpush1.msra.mxu0 0.0
    %144 = vmatprep.subr.mxu0 0.0
    %145 = vmatpush1.msra.mxu0 0.0
    %146 = vmatprep.subr.mxu0 0.0
    %147 = vmatpush1.msra.mxu0 0.0
    %148 = vmatprep.subr.mxu0 0.0
    %149 = vmatpush1.msra.mxu0 0.0
    %150 = vmatprep.subr.mxu0 0.0
    %151 = vmatpush1.msra.mxu0 0.0
    %152 = vmatprep.subr.mxu0 0.0
    %153 = vmatpush1.msra.mxu0 0.0
    %154 = vmatprep.subr.mxu0 0.0
    %155 = vmatpush1.msra.mxu0 0.0
    %156 = vmatprep.subr.mxu0 0.0
    %157 = vmatpush1.msra.mxu0 0.0
    %158 = vmatprep.subr.mxu0 0.0
    %159 = vmatpush1.msra.mxu0 0.0
    %160 = vmatprep.subr.mxu0 0.0
    %161 = vmatpush1.msra.mxu0 0.0
    %162 = vmatprep.subr.mxu0 0.0
    %163 = vmatpush1.msra.mxu0 0.0
    %164 = vmatprep.subr.mxu0 0.0
    %165 = vmatpush1.msra.mxu0 0.0
    %166 = vmatprep.subr.mxu0 0.0
    %167 = vmatpush1.msra.mxu0 0.0
    %168 = vmatprep.subr.mxu0 0.0
    %169 = vmatpush1.msra.mxu0 0.0
    %170 = vmatprep.subr.mxu0 0.0
    %171 = vmatpush1.msra.mxu0 0.0
    %172 = vmatprep.subr.mxu0 0.0
    %173 = vmatpush1.msra.mxu0 0.0
    %174 = vmatprep.subr.mxu0 0.0
    %175 = vmatpush1.msra.mxu0 0.0
    %176 = vmatprep.subr.mxu0 0.0
    %177 = vmatpush1.msra.mxu0 0.0
    %178 = vmatprep.subr.mxu0 0.0
    %179 = vmatpush1.msra.mxu0 0.0
    %180 = vmatprep.subr.mxu0 0.0
    %181 = vmatpush1.msra.mxu0 0.0
    %182 = vmatprep.subr.mxu0 0.0
    %183 = vmatpush1.msra.mxu0 0.0
    %184 = vmatprep.subr.mxu0 0.0
    %185 = vmatpush1.msra.mxu0 0.0
    %186 = vmatprep.subr.mxu0 0.0
    %187 = vmatpush1.msra.mxu0 0.0
    %188 = vmatprep.subr.mxu0 0.0
    %189 = vmatpush1.msra.mxu0 0.0
    %190 = vmatprep.mubr.f32.mxu0 0.0
    %191 = vmatmul.mubr.f32.gmra.mrb[0].mxu0 %v124
    %v192 = vpop.f32.mrb[0].mxu0
    %v193 = vadd.f32 0.0, %v192
    %v194 = vpop.f32.mrb[0].mxu0
    %195 = vdwg.mxu0
    %v197 = vrot.slane %v193, 6
    %v199 = vadd.f32 %v109, %v197
    %v200 = vtanh.pop %v199
    %v202 = vrot.slane %v200, 2
    %v203 = vsel %vm122, %v202, 0
    %205 = vmatprep.subr.mxu0 0.0
    %206 = vmatpush1.msra.mxu0 %v117
    %207 = vmatprep.subr.mxu0 0.0
    %208 = vmatpush1.msra.mxu0 %v118
    %209 = vmatprep.subr.mxu0 0.0
    %210 = vmatpush1.msra.mxu0 %v119
    %211 = vmatprep.subr.mxu0 0.0
    %212 = vmatpush1.msra.mxu0 %v120
    %213 = vmatprep.subr.mxu0 0.0
    %214 = vmatpush1.msra.mxu0 0.0
    %215 = vmatprep.subr.mxu0 0.0
    %216 = vmatpush1.msra.mxu0 0.0
    %217 = vmatprep.subr.mxu0 0.0
    %218 = vmatpush1.msra.mxu0 0.0
    %219 = vmatprep.subr.mxu0 0.0
    %220 = vmatpush1.msra.mxu0 0.0
    %221 = vmatprep.subr.mxu0 0.0
    %222 = vmatpush1.msra.mxu0 0.0
    %223 = vmatprep.subr.mxu0 0.0
    %224 = vmatpush1.msra.mxu0 0.0
    %225 = vmatprep.subr.mxu0 0.0
    %226 = vmatpush1.msra.mxu0 0.0
    %227 = vmatprep.subr.mxu0 0.0
    %228 = vmatpush1.msra.mxu0 0.0
    %229 = vmatprep.subr.mxu0 0.0
    %230 = vmatpush1.msra.mxu0 0.0
    %231 = vmatprep.subr.mxu0 0.0
    %232 = vmatpush1.msra.mxu0 0.0
    %233 = vmatprep.subr.mxu0 0.0
    %234 = vmatpush1.msra.mxu0 0.0
    %235 = vmatprep.subr.mxu0 0.0
    %236 = vmatpush1.msra.mxu0 0.0
    %237 = vmatprep.subr.mxu0 0.0
    %238 = vmatpush1.msra.mxu0 0.0
    %239 = vmatprep.subr.mxu0 0.0
    %240 = vmatpush1.msra.mxu0 0.0
    %241 = vmatprep.subr.mxu0 0.0
    %242 = vmatpush1.msra.mxu0 0.0
    %243 = vmatprep.subr.mxu0 0.0
    %244 = vmatpush1.msra.mxu0 0.0
    %245 = vmatprep.subr.mxu0 0.0
    %246 = vmatpush1.msra.mxu0 0.0
    %247 = vmatprep.subr.mxu0 0.0
    %248 = vmatpush1.msra.mxu0 0.0
    %249 = vmatprep.subr.mxu0 0.0
    %250 = vmatpush1.msra.mxu0 0.0
    %251 = vmatprep.subr.mxu0 0.0
    %252 = vmatpush1.msra.mxu0 0.0
    %253 = vmatprep.subr.mxu0 0.0
    %254 = vmatpush1.msra.mxu0 0.0
    %255 = vmatprep.subr.mxu0 0.0
    %256 = vmatpush1.msra.mxu0 0.0
    %257 = vmatprep.subr.mxu0 0.0
    %258 = vmatpush1.msra.mxu0 0.0
    %259 = vmatprep.subr.mxu0 0.0
    %260 = vmatpush1.msra.mxu0 0.0
    %261 = vmatprep.subr.mxu0 0.0
    %262 = vmatpush1.msra.mxu0 0.0
    %263 = vmatprep.subr.mxu0 0.0
    %264 = vmatpush1.msra.mxu0 0.0
    %265 = vmatprep.subr.mxu0 0.0
    %266 = vmatpush1.msra.mxu0 0.0
    %267 = vmatprep.subr.mxu0 0.0
    %268 = vmatpush1.msra.mxu0 0.0
    %269 = vmatprep.mubr.f32.mxu0 0.0
    %270 = vmatmul.mubr.f32.gmra.mrb[0].mxu0 %v203
    %v271 = vpop.f32.mrb[0].mxu0
    %v272 = vadd.f32 0.0, %v271
    %v273 = vpop.f32.mrb[0].mxu0
    %274 = vdwg.mxu0
    %v276 = vrot.slane %v272, 4
    %v278 = vadd.f32 %v109, %v276
    %v279 = vtanh.pop %v278
    %v281 = vrot.slane %v279, 4
    %v282 = vsel %vm122, %v281, 0
    %284 = vmatprep.subr.mxu0 0.0
    %285 = vmatpush1.msra.mxu0 %v117
    %286 = vmatprep.subr.mxu0 0.0
    %287 = vmatpush1.msra.mxu0 %v118
    %288 = vmatprep.subr.mxu0 0.0
    %289 = vmatpush1.msra.mxu0 %v119
    %290 = vmatprep.subr.mxu0 0.0
    %291 = vmatpush1.msra.mxu0 %v120
    %292 = vmatprep.subr.mxu0 0.0
    %293 = vmatpush1.msra.mxu0 0.0
    %294 = vmatprep.subr.mxu0 0.0
    %295 = vmatpush1.msra.mxu0 0.0
    %296 = vmatprep.subr.mxu0 0.0
    %297 = vmatpush1.msra.mxu0 0.0
    %298 = vmatprep.subr.mxu0 0.0
    %299 = vmatpush1.msra.mxu0 0.0
    %300 = vmatprep.subr.mxu0 0.0
    %301 = vmatpush1.msra.mxu0 0.0
    %302 = vmatprep.subr.mxu0 0.0
    %303 = vmatpush1.msra.mxu0 0.0
    %304 = vmatprep.subr.mxu0 0.0
    %305 = vmatpush1.msra.mxu0 0.0
    %306 = vmatprep.subr.mxu0 0.0
    %307 = vmatpush1.msra.mxu0 0.0
    %308 = vmatprep.subr.mxu0 0.0
    %309 = vmatpush1.msra.mxu0 0.0
    %310 = vmatprep.subr.mxu0 0.0
    %311 = vmatpush1.msra.mxu0 0.0
    %312 = vmatprep.subr.mxu0 0.0
    %313 = vmatpush1.msra.mxu0 0.0
    %314 = vmatprep.subr.mxu0 0.0
    %315 = vmatpush1.msra.mxu0 0.0
    %316 = vmatprep.subr.mxu0 0.0
    %317 = vmatpush1.msra.mxu0 0.0
    %318 = vmatprep.subr.mxu0 0.0
    %319 = vmatpush1.msra.mxu0 0.0
    %320 = vmatprep.subr.mxu0 0.0
    %321 = vmatpush1.msra.mxu0 0.0
    %322 = vmatprep.subr.mxu0 0.0
    %323 = vmatpush1.msra.mxu0 0.0
    %324 = vmatprep.subr.mxu0 0.0
    %325 = vmatpush1.msra.mxu0 0.0
    %326 = vmatprep.subr.mxu0 0.0
    %327 = vmatpush1.msra.mxu0 0.0
    %328 = vmatprep.subr.mxu0 0.0
    %329 = vmatpush1.msra.mxu0 0.0
    %330 = vmatprep.subr.mxu0 0.0
    %331 = vmatpush1.msra.mxu0 0.0
    %332 = vmatprep.subr.mxu0 0.0
    %333 = vmatpush1.msra.mxu0 0.0
    %334 = vmatprep.subr.mxu0 0.0
    %335 = vmatpush1.msra.mxu0 0.0
    %336 = vmatprep.subr.mxu0 0.0
    %337 = vmatpush1.msra.mxu0 0.0
    %338 = vmatprep.subr.mxu0 0.0
    %339 = vmatpush1.msra.mxu0 0.0
    %340 = vmatprep.subr.mxu0 0.0
    %341 = vmatpush1.msra.mxu0 0.0
    %342 = vmatprep.subr.mxu0 0.0
    %343 = vmatpush1.msra.mxu0 0.0
    %344 = vmatprep.subr.mxu0 0.0
    %345 = vmatpush1.msra.mxu0 0.0
    %346 = vmatprep.subr.mxu0 0.0
    %347 = vmatpush1.msra.mxu0 0.0
    %348 = vmatprep.mubr.f32.mxu0 0.0
    %349 = vmatmul.mubr.f32.gmra.mrb[0].mxu0 %v282
    %v350 = vpop.f32.mrb[0].mxu0
    %v351 = vadd.f32 0.0, %v350
    %v352 = vpop.f32.mrb[0].mxu0
    %353 = vdwg.mxu0
    %v355 = vrot.slane %v351, 2
    %v357 = vadd.f32 %v109, %v355
    %v358 = vtanh.pop %v357
    %v360 = vrot.slane %v358, 6
    %v361 = vsel %vm122, %v360, 0
    %363 = vmatprep.subr.mxu0 0.0
    %364 = vmatpush1.msra.mxu0 %v117
    %365 = vmatprep.subr.mxu0 0.0
    %366 = vmatpush1.msra.mxu0 %v118
    %367 = vmatprep.subr.mxu0 0.0
    %368 = vmatpush1.msra.mxu0 %v119
    %369 = vmatprep.subr.mxu0 0.0
    %370 = vmatpush1.msra.mxu0 %v120
    %371 = vmatprep.subr.mxu0 0.0
    %372 = vmatpush1.msra.mxu0 0.0
    %373 = vmatprep.subr.mxu0 0.0
    %374 = vmatpush1.msra.mxu0 0.0
    %375 = vmatprep.subr.mxu0 0.0
    %376 = vmatpush1.msra.mxu0 0.0
    %377 = vmatprep.subr.mxu0 0.0
    %378 = vmatpush1.msra.mxu0 0.0
    %379 = vmatprep.subr.mxu0 0.0
    %380 = vmatpush1.msra.mxu0 0.0
    %381 = vmatprep.subr.mxu0 0.0
    %382 = vmatpush1.msra.mxu0 0.0
    %383 = vmatprep.subr.mxu0 0.0
    %384 = vmatpush1.msra.mxu0 0.0
    %385 = vmatprep.subr.mxu0 0.0
    %386 = vmatpush1.msra.mxu0 0.0
    %387 = vmatprep.subr.mxu0 0.0
    %388 = vmatpush1.msra.mxu0 0.0
    %389 = vmatprep.subr.mxu0 0.0
    %390 = vmatpush1.msra.mxu0 0.0
    %391 = vmatprep.subr.mxu0 0.0
    %392 = vmatpush1.msra.mxu0 0.0
    %393 = vmatprep.subr.mxu0 0.0
    %394 = vmatpush1.msra.mxu0 0.0
    %395 = vmatprep.subr.mxu0 0.0
    %396 = vmatpush1.msra.mxu0 0.0
    %397 = vmatprep.subr.mxu0 0.0
    %398 = vmatpush1.msra.mxu0 0.0
    %399 = vmatprep.subr.mxu0 0.0
    %400 = vmatpush1.msra.mxu0 0.0
    %401 = vmatprep.subr.mxu0 0.0
    %402 = vmatpush1.msra.mxu0 0.0
    %403 = vmatprep.subr.mxu0 0.0
    %404 = vmatpush1.msra.mxu0 0.0
    %405 = vmatprep.subr.mxu0 0.0
    %406 = vmatpush1.msra.mxu0 0.0
    %407 = vmatprep.subr.mxu0 0.0
    %408 = vmatpush1.msra.mxu0 0.0
    %409 = vmatprep.subr.mxu0 0.0
    %410 = vmatpush1.msra.mxu0 0.0
    %411 = vmatprep.subr.mxu0 0.0
    %412 = vmatpush1.msra.mxu0 0.0
    %413 = vmatprep.subr.mxu0 0.0
    %414 = vmatpush1.msra.mxu0 0.0
    %415 = vmatprep.subr.mxu0 0.0
    %416 = vmatpush1.msra.mxu0 0.0
    %417 = vmatprep.subr.mxu0 0.0
    %418 = vmatpush1.msra.mxu0 0.0
    %419 = vmatprep.subr.mxu0 0.0
    %420 = vmatpush1.msra.mxu0 0.0
    %421 = vmatprep.subr.mxu0 0.0
    %422 = vmatpush1.msra.mxu0 0.0
    %423 = vmatprep.subr.mxu0 0.0
    %424 = vmatpush1.msra.mxu0 0.0
    %425 = vmatprep.subr.mxu0 0.0
    %426 = vmatpush1.msra.mxu0 0.0
    %427 = vmatprep.mubr.f32.mxu0 0.0
    %428 = vmatmul.mubr.f32.gmra.mrb[0].mxu0 %v361
    %v429 = vpop.f32.mrb[0].mxu0
    %v430 = vadd.f32 0.0, %v429
    %v431 = vpop.f32.mrb[0].mxu0
    %432 = vdwg.mxu0
    %v433 = vadd.f32 %v114, %v430
    %v434 = vtanh.pop %v433
    %v436 = vsel %vm122, %v434, 0
    %438 = vmatprep.subr.mxu0 0.0
    %439 = vmatpush1.msra.mxu0 %v117
    %440 = vmatprep.subr.mxu0 0.0
    %441 = vmatpush1.msra.mxu0 %v118
    %442 = vmatprep.subr.mxu0 0.0
    %443 = vmatpush1.msra.mxu0 %v119
    %444 = vmatprep.subr.mxu0 0.0
    %445 = vmatpush1.msra.mxu0 %v120
    %446 = vmatprep.subr.mxu0 0.0
    %447 = vmatpush1.msra.mxu0 0.0
    %448 = vmatprep.subr.mxu0 0.0
    %449 = vmatpush1.msra.mxu0 0.0
    %450 = vmatprep.subr.mxu0 0.0
    %451 = vmatpush1.msra.mxu0 0.0
    %452 = vmatprep.subr.mxu0 0.0
    %453 = vmatpush1.msra.mxu0 0.0
    %454 = vmatprep.subr.mxu0 0.0
    %455 = vmatpush1.msra.mxu0 0.0
    %456 = vmatprep.subr.mxu0 0.0
    %457 = vmatpush1.msra.mxu0 0.0
    %458 = vmatprep.subr.mxu0 0.0
    %459 = vmatpush1.msra.mxu0 0.0
    %460 = vmatprep.subr.mxu0 0.0
    %461 = vmatpush1.msra.mxu0 0.0
    %462 = vmatprep.subr.mxu0 0.0
    %463 = vmatpush1.msra.mxu0 0.0
    %464 = vmatprep.subr.mxu0 0.0
    %465 = vmatpush1.msra.mxu0 0.0
    %466 = vmatprep.subr.mxu0 0.0
    %467 = vmatpush1.msra.mxu0 0.0
    %468 = vmatprep.subr.mxu0 0.0
    %469 = vmatpush1.msra.mxu0 0.0
    %470 = vmatprep.subr.mxu0 0.0
    %471 = vmatpush1.msra.mxu0 0.0
    %472 = vmatprep.subr.mxu0 0.0
    %473 = vmatpush1.msra.mxu0 0.0
    %474 = vmatprep.subr.mxu0 0.0
    %475 = vmatpush1.msra.mxu0 0.0
    %476 = vmatprep.subr.mxu0 0.0
    %477 = vmatpush1.msra.mxu0 0.0
    %478 = vmatprep.subr.mxu0 0.0
    %479 = vmatpush1.msra.mxu0 0.0
    %480 = vmatprep.subr.mxu0 0.0
    %481 = vmatpush1.msra.mxu0 0.0
    %482 = vmatprep.subr.mxu0 0.0
    %483 = vmatpush1.msra.mxu0 0.0
    %484 = vmatprep.subr.mxu0 0.0
    %485 = vmatpush1.msra.mxu0 0.0
    %486 = vmatprep.subr.mxu0 0.0
    %487 = vmatpush1.msra.mxu0 0.0
    %488 = vmatprep.subr.mxu0 0.0
    %489 = vmatpush1.msra.mxu0 0.0
    %490 = vmatprep.subr.mxu0 0.0
    %491 = vmatpush1.msra.mxu0 0.0
    %492 = vmatprep.subr.mxu0 0.0
    %493 = vmatpush1.msra.mxu0 0.0
    %494 = vmatprep.subr.mxu0 0.0
    %495 = vmatpush1.msra.mxu0 0.0
    %496 = vmatprep.subr.mxu0 0.0
    %497 = vmatpush1.msra.mxu0 0.0
    %498 = vmatprep.subr.mxu0 0.0
    %499 = vmatpush1.msra.mxu0 0.0
    %500 = vmatprep.subr.mxu0 0.0
    %501 = vmatpush1.msra.mxu0 0.0
    %502 = vmatprep.mubr.f32.mxu0 0.0
    %503 = vmatmul.mubr.f32.gmra.mrb[0].mxu0 %v436
    %v504 = vpop.f32.mrb[0].mxu0
    %v505 = vadd.f32 0.0, %v504
    %v506 = vpop.f32.mrb[0].mxu0
    %507 = vdwg.mxu0
    %v509 = vrot.slane %v505, 6
    %v511 = vadd.f32 %v114, %v509
    %v512 = vtanh.pop %v511
    %v514 = vrot.slane %v512, 2
    %v515 = vsel %vm122, %v514, 0
    %517 = vmatprep.subr.mxu0 0.0
    %518 = vmatpush1.msra.mxu0 %v117
    %519 = vmatprep.subr.mxu0 0.0
    %520 = vmatpush1.msra.mxu0 %v118
    %521 = vmatprep.subr.mxu0 0.0
    %522 = vmatpush1.msra.mxu0 %v119
    %523 = vmatprep.subr.mxu0 0.0
    %524 = vmatpush1.msra.mxu0 %v120
    %525 = vmatprep.subr.mxu0 0.0
    %526 = vmatpush1.msra.mxu0 0.0
    %527 = vmatprep.subr.mxu0 0.0
    %528 = vmatpush1.msra.mxu0 0.0
    %529 = vmatprep.subr.mxu0 0.0
    %530 = vmatpush1.msra.mxu0 0.0
    %531 = vmatprep.subr.mxu0 0.0
    %532 = vmatpush1.msra.mxu0 0.0
    %533 = vmatprep.subr.mxu0 0.0
    %534 = vmatpush1.msra.mxu0 0.0
    %535 = vmatprep.subr.mxu0 0.0
    %536 = vmatpush1.msra.mxu0 0.0
    %537 = vmatprep.subr.mxu0 0.0
    %538 = vmatpush1.msra.mxu0 0.0
    %539 = vmatprep.subr.mxu0 0.0
    %540 = vmatpush1.msra.mxu0 0.0
    %541 = vmatprep.subr.mxu0 0.0
    %542 = vmatpush1.msra.mxu0 0.0
    %543 = vmatprep.subr.mxu0 0.0
    %544 = vmatpush1.msra.mxu0 0.0
    %545 = vmatprep.subr.mxu0 0.0
    %546 = vmatpush1.msra.mxu0 0.0
    %547 = vmatprep.subr.mxu0 0.0
    %548 = vmatpush1.msra.mxu0 0.0
    %549 = vmatprep.subr.mxu0 0.0
    %550 = vmatpush1.msra.mxu0 0.0
    %551 = vmatprep.subr.mxu0 0.0
    %552 = vmatpush1.msra.mxu0 0.0
    %553 = vmatprep.subr.mxu0 0.0
    %554 = vmatpush1.msra.mxu0 0.0
    %555 = vmatprep.subr.mxu0 0.0
    %556 = vmatpush1.msra.mxu0 0.0
    %557 = vmatprep.subr.mxu0 0.0
    %558 = vmatpush1.msra.mxu0 0.0
    %559 = vmatprep.subr.mxu0 0.0
    %560 = vmatpush1.msra.mxu0 0.0
    %561 = vmatprep.subr.mxu0 0.0
    %562 = vmatpush1.msra.mxu0 0.0
    %563 = vmatprep.subr.mxu0 0.0
    %564 = vmatpush1.msra.mxu0 0.0
    %565 = vmatprep.subr.mxu0 0.0
    %566 = vmatpush1.msra.mxu0 0.0
    %567 = vmatprep.subr.mxu0 0.0
    %568 = vmatpush1.msra.mxu0 0.0
    %569 = vmatprep.subr.mxu0 0.0
    %570 = vmatpush1.msra.mxu0 0.0
    %571 = vmatprep.subr.mxu0 0.0
    %572 = vmatpush1.msra.mxu0 0.0
    %573 = vmatprep.subr.mxu0 0.0
    %574 = vmatpush1.msra.mxu0 0.0
    %575 = vmatprep.subr.mxu0 0.0
    %576 = vmatpush1.msra.mxu0 0.0
    %577 = vmatprep.subr.mxu0 0.0
    %578 = vmatpush1.msra.mxu0 0.0
    %579 = vmatprep.subr.mxu0 0.0
    %580 = vmatpush1.msra.mxu0 0.0
    %581 = vmatprep.mubr.f32.mxu0 0.0
    %582 = vmatmul.mubr.f32.gmra.mrb[0].mxu0 %v515
    %v583 = vpop.f32.mrb[0].mxu0
    %v584 = vadd.f32 0.0, %v583
    %v585 = vpop.f32.mrb[0].mxu0
    %586 = vdwg.mxu0
    %v588 = vrot.slane %v584, 4
    %v590 = vadd.f32 %v114, %v588
    %v591 = vtanh.pop %v590
    %v593 = vrot.slane %v591, 4
    %v594 = vsel %vm122, %v593, 0
    %596 = vmatprep.subr.mxu0 0.0
    %597 = vmatpush1.msra.mxu0 %v117
    %598 = vmatprep.subr.mxu0 0.0
    %599 = vmatpush1.msra.mxu0 %v118
    %600 = vmatprep.subr.mxu0 0.0
    %601 = vmatpush1.msra.mxu0 %v119
    %602 = vmatprep.subr.mxu0 0.0
    %603 = vmatpush1.msra.mxu0 %v120
    %604 = vmatprep.subr.mxu0 0.0
    %605 = vmatpush1.msra.mxu0 0.0
    %606 = vmatprep.subr.mxu0 0.0
    %607 = vmatpush1.msra.mxu0 0.0
    %608 = vmatprep.subr.mxu0 0.0
    %609 = vmatpush1.msra.mxu0 0.0
    %610 = vmatprep.subr.mxu0 0.0
    %611 = vmatpush1.msra.mxu0 0.0
    %612 = vmatprep.subr.mxu0 0.0
    %613 = vmatpush1.msra.mxu0 0.0
    %614 = vmatprep.subr.mxu0 0.0
    %615 = vmatpush1.msra.mxu0 0.0
    %616 = vmatprep.subr.mxu0 0.0
    %617 = vmatpush1.msra.mxu0 0.0
    %618 = vmatprep.subr.mxu0 0.0
    %619 = vmatpush1.msra.mxu0 0.0
    %620 = vmatprep.subr.mxu0 0.0
    %621 = vmatpush1.msra.mxu0 0.0
    %622 = vmatprep.subr.mxu0 0.0
    %623 = vmatpush1.msra.mxu0 0.0
    %624 = vmatprep.subr.mxu0 0.0
    %625 = vmatpush1.msra.mxu0 0.0
    %626 = vmatprep.subr.mxu0 0.0
    %627 = vmatpush1.msra.mxu0 0.0
    %628 = vmatprep.subr.mxu0 0.0
    %629 = vmatpush1.msra.mxu0 0.0
    %630 = vmatprep.subr.mxu0 0.0
    %631 = vmatpush1.msra.mxu0 0.0
    %632 = vmatprep.subr.mxu0 0.0
    %633 = vmatpush1.msra.mxu0 0.0
    %634 = vmatprep.subr.mxu0 0.0
    %635 = vmatpush1.msra.mxu0 0.0
    %636 = vmatprep.subr.mxu0 0.0
    %637 = vmatpush1.msra.mxu0 0.0
    %638 = vmatprep.subr.mxu0 0.0
    %639 = vmatpush1.msra.mxu0 0.0
    %640 = vmatprep.subr.mxu0 0.0
    %641 = vmatpush1.msra.mxu0 0.0
    %642 = vmatprep.subr.mxu0 0.0
    %643 = vmatpush1.msra.mxu0 0.0
    %644 = vmatprep.subr.mxu0 0.0
    %645 = vmatpush1.msra.mxu0 0.0
    %646 = vmatprep.subr.mxu0 0.0
    %647 = vmatpush1.msra.mxu0 0.0
    %648 = vmatprep.subr.mxu0 0.0
    %649 = vmatpush1.msra.mxu0 0.0
    %650 = vmatprep.subr.mxu0 0.0
    %651 = vmatpush1.msra.mxu0 0.0
    %652 = vmatprep.subr.mxu0 0.0
    %653 = vmatpush1.msra.mxu0 0.0
    %654 = vmatprep.subr.mxu0 0.0
    %655 = vmatpush1.msra.mxu0 0.0
    %656 = vmatprep.subr.mxu0 0.0
    %657 = vmatpush1.msra.mxu0 0.0
    %658 = vmatprep.subr.mxu0 0.0
    %659 = vmatpush1.msra.mxu0 0.0
    %660 = vmatprep.mubr.f32.mxu0 0.0
    %661 = vmatmul.mubr.f32.gmra.mrb[0].mxu0 %v594
    %v662 = vpop.f32.mrb[0].mxu0
    %v663 = vadd.f32 0.0, %v662
    %v664 = vpop.f32.mrb[0].mxu0
    %665 = vdwg.mxu0
    %v667 = vrot.slane %v663, 2
    %v669 = vadd.f32 %v114, %v667
    %v670 = vtanh.pop %v669
    %v671 = vld [vmem:[%s4] sm:$0xff]
    %v672 = vld [vmem:[%s4 + $0x8] sm:$0xff]
    %v673 = vld [vmem:[%s4 + $0x10] sm:$0xff]
    %v674 = vld [vmem:[%s4 + $0x18] sm:$0xff]
    %v675 = vld [vmem:[%s5] sm:$0x1]
    %v677 = vlaneseq
    %v678 = vshrl.u32 %v677, 7
    %v679 = vsub.s32 0, %v678
    %v680 = vrot.slane %v675, %v679
    %v683 = vrot.slane %v670, 6
    %v684 = vsel %vm122, %v683, 0
    %686 = vmatprep.subr.mxu0 0.0
    %687 = vmatpush1.msra.mxu0 %v671
    %688 = vmatprep.subr.mxu0 0.0
    %689 = vmatpush1.msra.mxu0 %v672
    %690 = vmatprep.subr.mxu0 0.0
    %691 = vmatpush1.msra.mxu0 %v673
    %692 = vmatprep.subr.mxu0 0.0
    %693 = vmatpush1.msra.mxu0 %v674
    %694 = vmatprep.subr.mxu0 0.0
    %695 = vmatpush1.msra.mxu0 0.0
    %696 = vmatprep.subr.mxu0 0.0
    %697 = vmatpush1.msra.mxu0 0.0
    %698 = vmatprep.subr.mxu0 0.0
    %699 = vmatpush1.msra.mxu0 0.0
    %700 = vmatprep.subr.mxu0 0.0
    %701 = vmatpush1.msra.mxu0 0.0
    %702 = vmatprep.subr.mxu0 0.0
    %703 = vmatpush1.msra.mxu0 0.0
    %704 = vmatprep.subr.mxu0 0.0
    %705 = vmatpush1.msra.mxu0 0.0
    %706 = vmatprep.subr.mxu0 0.0
    %707 = vmatpush1.msra.mxu0 0.0
    %708 = vmatprep.subr.mxu0 0.0
    %709 = vmatpush1.msra.mxu0 0.0
    %710 = vmatprep.subr.mxu0 0.0
    %711 = vmatpush1.msra.mxu0 0.0
    %712 = vmatprep.subr.mxu0 0.0
    %713 = vmatpush1.msra.mxu0 0.0
    %714 = vmatprep.subr.mxu0 0.0
    %715 = vmatpush1.msra.mxu0 0.0
    %716 = vmatprep.subr.mxu0 0.0
    %717 = vmatpush1.msra.mxu0 0.0
    %718 = vmatprep.subr.mxu0 0.0
    %719 = vmatpush1.msra.mxu0 0.0
    %720 = vmatprep.subr.mxu0 0.0
    %721 = vmatpush1.msra.mxu0 0.0
    %722 = vmatprep.subr.mxu0 0.0
    %723 = vmatpush1.msra.mxu0 0.0
    %724 = vmatprep.subr.mxu0 0.0
    %725 = vmatpush1.msra.mxu0 0.0
    %726 = vmatprep.subr.mxu0 0.0
    %727 = vmatpush1.msra.mxu0 0.0
    %728 = vmatprep.subr.mxu0 0.0
    %729 = vmatpush1.msra.mxu0 0.0
    %730 = vmatprep.subr.mxu0 0.0
    %731 = vmatpush1.msra.mxu0 0.0
    %732 = vmatprep.subr.mxu0 0.0
    %733 = vmatpush1.msra.mxu0 0.0
    %734 = vmatprep.subr.mxu0 0.0
    %735 = vmatpush1.msra.mxu0 0.0
    %736 = vmatprep.subr.mxu0 0.0
    %737 = vmatpush1.msra.mxu0 0.0
    %738 = vmatprep.subr.mxu0 0.0
    %739 = vmatpush1.msra.mxu0 0.0
    %740 = vmatprep.subr.mxu0 0.0
    %741 = vmatpush1.msra.mxu0 0.0
    %742 = vmatprep.subr.mxu0 0.0
    %743 = vmatpush1.msra.mxu0 0.0
    %744 = vmatprep.subr.mxu0 0.0
    %745 = vmatpush1.msra.mxu0 0.0
    %746 = vmatprep.subr.mxu0 0.0
    %747 = vmatpush1.msra.mxu0 0.0
    %748 = vmatprep.subr.mxu0 0.0
    %749 = vmatpush1.msra.mxu0 0.0
    %750 = vmatprep.mubr.f32.mxu0 0.0
    %751 = vmatmul.mubr.f32.gmra.mrb[0].mxu0 %v684
    %v752 = vpop.f32.mrb[0].mxu0
    %v753 = vadd.f32 %v680, %v752
    %v754 = vpop.f32.mrb[0].mxu0
    %755 = vdwg.mxu0
    %vm756 = vcmask 58368
    %757 = vst.msk [vmem:[#allocation2] sm:$0x3] %vm756, %v753
    // Predicated region
    $region26: #{rnn_forward.1} parent=1 // pred_check
      _
    $region27: #{rnn_forward.1} parent=1 // pred_check_branch
      %759 = sbr.rel (0) target = $region29
    $region28: #{rnn_forward.1} parent=1 // pred_region
      %s761 = ssub.s32 32, 32
      %762 = vsyncadd [#allocation3], %s761
      %s764 = sshll.u32 [#allocation2], 4
      %s765 = int_to_ptr.vmem [resolvable:$true] %s764
      %767 = dma.vmem_to_hbm [thread:$0]  %s765, 32, %s6, [#allocation3]
    $region29: #{rnn_forward.1} parent=1 // pred_fallthru
      _
    // Predicated region
    $region30: #{rnn_forward.1} parent=1 // pred_check
      _
    $region31: #{rnn_forward.1} parent=1 // pred_check_branch
      %769 = sbr.rel (0) target = $region33
    $region32: #{rnn_forward.1} parent=1 // pred_region
      %770 = dma.done [#allocation3], 32
    $region33: #{rnn_forward.1} parent=1 // pred_fallthru
      _
    %771 = vsyncpa [#allocation3], 1

</llo_original>
